<compile_context>
chip_gen: v7x
topology: tpu7x:2x2x1
jax: 0.10.0
libtpu: 0.0.40
codegen_flags: <defaults>
</compile_context>

<pallas_src>
import jax
import jax.numpy as jnp
from jax.experimental import pallas as pl
from jax.experimental.pallas import tpu as pltpu


_LANE_CANDIDATES = (2048, 1024, 512, 256, 128)
_MAX_DMA_CHUNKS = 8
_TARGET_CHUNK_BYTES = 16 * 1024 * 1024  # ~16 MiB per DMA chunk


def _make_dma_copy_kernel(chunks):
    """Build a kernel that copies HBM->HBM in `chunks` = [(start, size), ...]."""

    def kernel(x_hbm, o_hbm, sems):
        copies = []
        for idx, (start, size) in enumerate(chunks):
            cp = pltpu.make_async_copy(
                x_hbm.at[pl.ds(start, size)],
                o_hbm.at[pl.ds(start, size)],
                sems.at[idx],
            )
            cp.start()
            copies.append(cp)
        for cp in copies:
            cp.wait()

    return kernel


def _materialized_copy(x: jax.Array) -> jax.Array:
    """Force a fresh HBM buffer holding the same values, via HBM->HBM DMA."""
    orig_shape = x.shape
    total = x.size
    itemsize = x.dtype.itemsize
    nbytes = total * itemsize

    # Lane-dense 2D reshape when possible (free metadata change for a
    # contiguous array); otherwise keep the original shape — DMA copies any
    # contiguous slab without a vreg pass, so no masked-store penalty.
    if total % 128 == 0:
        cols = next(c for c in _LANE_CANDIDATES if total % c == 0)
        work = x.reshape(total // cols, cols)
    else:
        work = x

    rows = work.shape[0]
    n_chunks = max(1, min(_MAX_DMA_CHUNKS, rows,
                          pl.cdiv(nbytes, _TARGET_CHUNK_BYTES)))
    base, rem = divmod(rows, n_chunks)
    chunks, start = [], 0
    for c in range(n_chunks):
        size = base + (1 if c < rem else 0)
        chunks.append((start, size))
        start += size

    out = pl.pallas_call(
        _make_dma_copy_kernel(chunks),
        out_shape=jax.ShapeDtypeStruct(work.shape, work.dtype),
        in_specs=[pl.BlockSpec(memory_space=pl.ANY)],
        out_specs=pl.BlockSpec(memory_space=pl.ANY),
        scratch_shapes=[pltpu.SemaphoreType.DMA((len(chunks),))],
        cost_estimate=pl.CostEstimate(
            flops=0, transcendentals=0, bytes_accessed=2 * nbytes),
    )(work)

    return out.reshape(orig_shape)


def identity(x: jax.Array, *, force_copy: bool = False) -> jax.Array:
    """Pallas implementation of Identity.forward.

    Default (and optimal) path: return x unchanged — zero HBM traffic, no
    kernel launch. Set force_copy=True to materialize a fresh output buffer
    via a direct HBM->HBM DMA Pallas kernel (useful only when a distinct
    buffer is explicitly required).
    """
    if not force_copy:
        return x
    # Degenerate inputs: a copy kernel is pure overhead and identity
    # semantics allow returning the input directly.
    if x.ndim == 0 or x.size == 0:
        return x
    return _materialized_copy(x)


if __name__ == "__main__":
    key = jax.random.PRNGKey(0)
    # Small NCHW-style input, consistent with typical conv-net usage.
    x = jax.random.normal(key, (2, 4, 16, 16), dtype=jnp.float32)

    # Default path: no kernel, zero HBM traffic.
    y = jax.block_until_ready(identity(x))
    assert y.shape == x.shape
    assert y.dtype == x.dtype
    assert bool(jnp.array_equal(y, x))

    # Forced materialized-copy path: exercises the HBM->HBM DMA kernel
    # (lane-dense 2D reshape branch; total elems is a multiple of 128).
    y_copy = jax.block_until_ready(identity(x, force_copy=True))
    assert y_copy.shape == x.shape
    assert y_copy.dtype == x.dtype
    assert bool(jnp.array_equal(y_copy, x))

    # Non-128-multiple total: original-shape DMA branch (no masked stores).
    x_odd = jax.random.normal(jax.random.PRNGKey(1), (2, 3, 16, 17),
                              dtype=jnp.float32)
    y_odd = jax.block_until_ready(identity(x_odd, force_copy=True))
    assert y_odd.shape == x_odd.shape
    assert y_odd.dtype == x_odd.dtype
    assert bool(jnp.array_equal(y_odd, x_odd))

    print("KERNEL_OK")
</pallas_src>

<mosaic_0001>
module attributes {stable_mosaic.version = 11 : i64} {
  func.func @kernel(%arg0: memref<1x2048xf32, #tpu.memory_space<any>>, %arg1: memref<1x2048xf32, #tpu.memory_space<any>>, %arg2: memref<1x!tpu.dma_semaphore, #tpu.memory_space<semaphore_mem>>) attributes {dimension_semantics = [], scalar_prefetch = 0 : i64, scratch_operands = 1 : i64, tpu.core_type = #tpu.core_type<tc>} {
    %c0_i32 = arith.constant 0 : i32
    %c0_i32_0 = arith.constant 0 : i32
    %c0_i32_1 = arith.constant 0 : i32
    %0 = tpu.memref_slice %arg0[%c0_i32_0, %c0_i32_1] : memref<1x2048xf32, #tpu.memory_space<any>> -> memref<1x2048xf32, #tpu.memory_space<any>>
    %c0_i32_2 = arith.constant 0 : i32
    %c0_i32_3 = arith.constant 0 : i32
    %1 = tpu.memref_slice %arg1[%c0_i32_2, %c0_i32_3] : memref<1x2048xf32, #tpu.memory_space<any>> -> memref<1x2048xf32, #tpu.memory_space<any>>
    %2 = tpu.memref_slice %arg2[%c0_i32] : memref<1x!tpu.dma_semaphore, #tpu.memory_space<semaphore_mem>> -> memref<1x!tpu.dma_semaphore, #tpu.memory_space<semaphore_mem>>
    %3 = tpu.memref_squeeze %2 : memref<1x!tpu.dma_semaphore, #tpu.memory_space<semaphore_mem>> -> memref<!tpu.dma_semaphore, #tpu.memory_space<semaphore_mem>>
    tpu.enqueue_dma source(%0 : memref<1x2048xf32, #tpu.memory_space<any>>) target(%1 : memref<1x2048xf32, #tpu.memory_space<any>>) target_semaphore(%3 : memref<!tpu.dma_semaphore, #tpu.memory_space<semaphore_mem>>)
    %c0_i32_4 = arith.constant 0 : i32
    %c0_i32_5 = arith.constant 0 : i32
    %c0_i32_6 = arith.constant 0 : i32
    %4 = tpu.memref_slice %arg0[%c0_i32_5, %c0_i32_6] : memref<1x2048xf32, #tpu.memory_space<any>> -> memref<1x2048xf32, #tpu.memory_space<any>>
    %c0_i32_7 = arith.constant 0 : i32
    %c0_i32_8 = arith.constant 0 : i32
    %5 = tpu.memref_slice %arg1[%c0_i32_7, %c0_i32_8] : memref<1x2048xf32, #tpu.memory_space<any>> -> memref<1x2048xf32, #tpu.memory_space<any>>
    %6 = tpu.memref_slice %arg2[%c0_i32_4] : memref<1x!tpu.dma_semaphore, #tpu.memory_space<semaphore_mem>> -> memref<1x!tpu.dma_semaphore, #tpu.memory_space<semaphore_mem>>
    %7 = tpu.memref_squeeze %6 : memref<1x!tpu.dma_semaphore, #tpu.memory_space<semaphore_mem>> -> memref<!tpu.dma_semaphore, #tpu.memory_space<semaphore_mem>>
    tpu.wait_dma2 semaphore(%7 : memref<!tpu.dma_semaphore, #tpu.memory_space<semaphore_mem>>) src(%4 : memref<1x2048xf32, #tpu.memory_space<any>>) dst(%5 : memref<1x2048xf32, #tpu.memory_space<any>>)
    return
  }
}

</mosaic_0001>

<llo_original>
// kernel: tpu_custom_call.1
$region0: #{tpu_custom_call.1}
  #allocation0 [shape = 'u32[]', space=smem, size = 0x4, offset = 0x4, fixed_abs, tag = 'smem constant byte address 0x4 - core index']
  #allocation1 [shape = 'u32[144,128]{1,0:T(1,128)}', space=vmem, size = 0x12000, scoped, tag = 'internal scratch']
  #allocation2 [shape = 's32[1]{0}', space=sflag, size = 0x4, scoped, tag = 'scratch operand']
  #allocation3 [shape = 's32[]', space=sflag, size = 0x4, offset = 0, fixed_abs, tag = 'sflag constant byte address 0x0 - dummy sync flag']
  #allocation4 [shape = 'u32[0]{0}', space=smem, size = 0, offset = 0, fixed_abs, tag = 'smem constant byte address 0x0 - null']
  %s0 = inlined_call_operand.hbm [shape: f32[1,2048], index: 0, kind: input, shape index: {}]
  %s1 = inlined_call_operand.hbm [shape: f32[1,2048], index: 1, kind: output, shape index: {}]
  %s2 = sld [smem:[#allocation0]]
  $region2: #{tpu_custom_call.1} parent=0
    _
  %s4 = ssub.s32 1, %s2
  %s5 = scalar_select 0, %s4, %s2
  %s7 = sshll.u32 1, 14
  %s8 = sxor.u32 4294967295, %s7
  %s11 = sshll.u32 3, 24
  %s12 = sxor.u32 4294967295, %s11
  %s13 = sand.u32 0, %s12
  %s15 = sor.u32 %s13, 0
  %18 = dma.general %s0, 256, %s1, [#allocation2], [#allocation3], [#allocation4], %s15, 0
  %s19 = smul.u32 1, 16
  %s20 = sshll.u32 %s19, 4
  %21 = dma.done [#allocation2], %s20
  %22 = vsyncmov [#allocation2]
  %s23 = vpop.sfrf %22
  %p24 = scmp.eq.s32.totalorder %s23, 0
  %p25 = pneg %p24
  %27 = shalt.err (%p25)

</llo_original>
